<compile_context>
chip_gen: v6e
topology: v6e:2x2x1
jax: 0.10.0
libtpu: 0.0.40
codegen_flags: <defaults>
</compile_context>

<pallas_src>
import numpy as np
import jax
import jax.numpy as jnp
from jax.experimental import pallas as pl
from jax.experimental.pallas import tpu as pltpu


def _round_up(x: int, m: int) -> int:
    return ((x + m - 1) // m) * m


def _make_kernel(half: int, L: int, TN: int, TYZ: int):
    scale_f = float(half)
    minc = float(-half)
    # Sentinel x for invalid (padding) points: |px - ix| >= half+3 >= 1 for every
    # ix in [-half, half-1], so the hat weight is exactly 0 -> no select on wxT.
    invalid_px = float(2 * half + 2)

    def kernel(yz_ref, rows_ref, cols_ref, out_ref):
        n = pl.program_id(2)   # point-tile index (reduction axis)

        @pl.when(n == 0)
        def _init():
            out_ref[...] = jnp.zeros_like(out_ref)

        # ---- LHS: wxT (L, TN) -- grid-x on sublanes, point index on lanes ----
        rows = rows_ref[0]                                        # (3, TN)
        valid = (rows[0:1, :] + rows[1:2, :] + rows[2:3, :]) != 0.0   # (1, TN)
        px = jnp.where(valid, rows[0:1, :] * scale_f, invalid_px)     # (1, TN)
        ix = (jax.lax.broadcasted_iota(jnp.int32, (L, TN), 0)
              .astype(jnp.float32) + minc)                        # (L, TN)
        wxT = jnp.maximum(1.0 - jnp.abs(px - ix), 0.0)            # (L, TN)

        # ---- RHS: wyz (TN, TYZ) -- point index on sublanes, yz on lanes ------
        cols = cols_ref[0]                                        # (TN, 3)
        py = cols[:, 1:2] * scale_f                               # (TN, 1)
        pz = cols[:, 2:3] * scale_f                               # (TN, 1)
        # Hoisted per-chunk constants (precomputed host-side): integer y/z grid
        # coordinates of this yz chunk, already offset by -half.
        iy = yz_ref[0:1, :]                                       # (1, TYZ)
        iz = yz_ref[1:2, :]                                       # (1, TYZ)
        wyz = (jnp.maximum(1.0 - jnp.abs(py - iy), 0.0) *
               jnp.maximum(1.0 - jnp.abs(pz - iz), 0.0))          # (TN, TYZ)

        # grid[x, yz] += sum_n wxT[x, n] * wyz[n, yz]
        out_ref[0] += jax.lax.dot_general(
            wxT, wyz, (((1,), (0,)), ((), ())),
            preferred_element_type=jnp.float32)

    return kernel


def gridding(ptcloud, scale: int):
    """Pallas equivalent of Gridding(scale).forward(ptcloud).

    ptcloud: (B, N, 3) float32 -> returns (B, (2*(scale//2))**3) float32.
    """
    B, N, _ = ptcloud.shape
    half = scale // 2
    assert half > 0, "scale//2 must be > 0"
    L = 2 * half
    LYZ = L * L

    pts = ptcloud.astype(jnp.float32)

    # Point-axis tile (reduction): multiple of 128 so the lane dim stays dense.
    # Raised to 1024 (from 512) to amortize per-grid-step overhead for large N.
    TN = min(1024, _round_up(N, 128))
    N_pad = _round_up(N, TN)
    if N_pad != N:
        # zero-padded points have coordinate sum == 0 -> masked out in-kernel.
        pts = jnp.pad(pts, ((0, 0), (0, N_pad - N), (0, 0)))

    # yz-chunk tile: bounds the (TN, TYZ) weight-slab footprint for large L and
    # keeps output stores lane-dense (multiple of 128) whenever possible.
    if LYZ <= 1024:
        TYZ = LYZ
    else:
        TYZ = next((t for t in (1024, 512, 256, 128) if LYZ % t == 0), LYZ)
    # v7x megacore: guarantee at least 2 "parallel" grid iterations when possible
    # (B * num_yz_chunks >= 2) by halving TYZ while it stays a multiple of 128.
    while B * (LYZ // TYZ) < 2 and TYZ % 256 == 0:
        TYZ //= 2

    # Hoisted yz grid-coordinate rows: row0 = y(m) - half, row1 = z(m) - half.
    m = np.arange(LYZ)
    yzrows = jnp.asarray(
        np.stack([m // L, m % L]).astype(np.float32) - float(half))   # (2, LYZ)

    pts_cols = pts                               # (B, N_pad, 3): point on sublanes (y/z)
    pts_rows = jnp.transpose(pts, (0, 2, 1))     # (B, 3, N_pad): point on lanes (x, mask)

    grid = (B, LYZ // TYZ, N_pad // TN)

    out = pl.pallas_call(
        _make_kernel(half, L, TN, TYZ),
        out_shape=jax.ShapeDtypeStruct((B, L, LYZ), jnp.float32),
        grid_spec=pltpu.PrefetchScalarGridSpec(
            num_scalar_prefetch=0,
            grid=grid,
            in_specs=[
                pl.BlockSpec((2, TYZ), lambda b, c, n: (0, c)),       # hoisted iy/iz
                pl.BlockSpec((1, 3, TN), lambda b, c, n: (b, 0, n)),  # rows (x, mask)
                pl.BlockSpec((1, TN, 3), lambda b, c, n: (b, n, 0)),  # cols (y, z)
            ],
            out_specs=pl.BlockSpec((1, L, TYZ), lambda b, c, n: (b, 0, c)),
        ),
        compiler_params=pltpu.CompilerParams(
            dimension_semantics=("parallel", "parallel", "arbitrary"),
            # 48 MiB: headroom for the TN=1024 weight slab + elementwise temps,
            # still comfortably under v7x's 64 MiB physical VMEM per TensorCore.
            vmem_limit_bytes=48 * 1024 * 1024,
        ),
    )(yzrows, pts_rows, pts_cols)

    return out.reshape(B, L * LYZ)


def _gridding_reference(pts, scale: int):
    """Pure-numpy reference with identical semantics (trilinear splat, padding drop)."""
    half = scale // 2
    L = 2 * half
    B, N, _ = pts.shape
    coords = np.arange(L, dtype=np.float64) - half
    p = pts.astype(np.float64) * half
    out = np.zeros((B, L, L, L), np.float64)
    for b in range(B):
        for n in range(N):
            if (p[b, n, 0] + p[b, n, 1] + p[b, n, 2]) == 0.0:
                continue
            wx = np.maximum(1.0 - np.abs(p[b, n, 0] - coords), 0.0)
            wy = np.maximum(1.0 - np.abs(p[b, n, 1] - coords), 0.0)
            wz = np.maximum(1.0 - np.abs(p[b, n, 2] - coords), 0.0)
            out[b] += wx[:, None, None] * wy[None, :, None] * wz[None, None, :]
    return out.reshape(B, -1).astype(np.float32)


if __name__ == "__main__":
    key = jax.random.PRNGKey(0)

    # Config 1: Gridding(scale=16) -> 16x16x16 grid, B=2, N=128 (single yz chunk,
    # B=2 keeps >= 2 parallel grid iterations for v7x).
    B1, N1, S1 = 2, 128, 16
    k1, k2 = jax.random.split(key)
    pts1 = jax.random.uniform(k1, (B1, N1, 3), jnp.float32, minval=-0.8, maxval=0.7)
    pts1 = pts1.at[:, -16:, :].set(0.0)          # padding points (dropped)
    out1 = jax.block_until_ready(gridding(pts1, S1))
    assert out1.shape == (B1, 16 * 16 * 16), out1.shape
    ref1 = _gridding_reference(np.asarray(pts1), S1)
    np.testing.assert_allclose(np.asarray(out1), ref1, rtol=1e-4, atol=2e-4)

    # Config 2: Gridding(scale=64) -> 64x64x64 grid, B=1, N=64
    # (exercises yz chunking, N padding to the 128-point tile, and the accumulator).
    B2, N2, S2 = 1, 64, 64
    pts2 = jax.random.uniform(k2, (B2, N2, 3), jnp.float32, minval=-0.8, maxval=0.7)
    pts2 = pts2.at[:, -8:, :].set(0.0)
    out2 = jax.block_until_ready(gridding(pts2, S2))
    assert out2.shape == (B2, 64 * 64 * 64), out2.shape
    ref2 = _gridding_reference(np.asarray(pts2), S2)
    np.testing.assert_allclose(np.asarray(out2), ref2, rtol=1e-4, atol=2e-4)

    print("KERNEL_OK")
</pallas_src>

<mosaic_0001>
module attributes {stable_mosaic.version = 11 : i64} {
  func.func @kernel(%arg0: i32, %arg1: i32, %arg2: i32, %arg3: memref<2x256xf32, #tpu.memory_space<vmem>>, %arg4: memref<1x3x128xf32, #tpu.memory_space<vmem>>, %arg5: memref<1x128x3xf32, #tpu.memory_space<vmem>>, %arg6: memref<1x16x256xf32, #tpu.memory_space<vmem>>) attributes {dimension_semantics = [#tpu.dimension_semantics<parallel>, #tpu.dimension_semantics<parallel>, #tpu.dimension_semantics<arbitrary>], iteration_bounds = array<i64: 2, 1, 1>, scalar_prefetch = 0 : i64, scratch_operands = 0 : i64, tpu.core_type = #tpu.core_type<tc>, window_params = [{transform_indices = @transform_0, window_bounds = array<i64: 2, 256>}, {transform_indices = @transform_1, window_bounds = array<i64: 1, 3, 128>}, {transform_indices = @transform_2, window_bounds = array<i64: 1, 128, 3>}, {transform_indices = @transform_3, window_bounds = array<i64: 1, 16, 256>}]} {
    %c0_i32 = arith.constant 0 : i32
    %0 = arith.cmpi eq, %arg2, %c0_i32 : i32
    %1 = arith.extui %0 : i1 to i32
    %c0_i32_0 = arith.constant 0 : i32
    %2 = arith.cmpi ne, %1, %c0_i32_0 : i32
    scf.if %2 {
      %cst_27 = arith.constant 0.000000e+00 : f32
      %62 = vector.broadcast %cst_27 : f32 to vector<1x16x256xf32>
      %c0_28 = arith.constant 0 : index
      %c0_29 = arith.constant 0 : index
      %c0_30 = arith.constant 0 : index
      %63 = vector.load %arg6[%c0_28, %c0_29, %c0_30] : memref<1x16x256xf32, #tpu.memory_space<vmem>>, vector<1x16x256xf32>
      tpu.vector_store %arg6[%c0_28, %c0_29, %c0_30], %62 {strides = array<i32>} : memref<1x16x256xf32, #tpu.memory_space<vmem>>, vector<1x16x256xf32>,
    } else {
    }
    %c0 = arith.constant 0 : index
    %c0_1 = arith.constant 0 : index
    %c0_2 = arith.constant 0 : index
    %3 = vector.load %arg4[%c0, %c0_1, %c0_2] : memref<1x3x128xf32, #tpu.memory_space<vmem>>, vector<1x3x128xf32>
    %4 = vector.shape_cast %3 : vector<1x3x128xf32> to vector<3x128xf32>
    %5 = vector.extract_strided_slice %4 {offsets = [0, 0], sizes = [1, 128], strides = [1, 1]} : vector<3x128xf32> to vector<1x128xf32>
    %6 = vector.extract_strided_slice %4 {offsets = [1, 0], sizes = [1, 128], strides = [1, 1]} : vector<3x128xf32> to vector<1x128xf32>
    %7 = arith.addf %5, %6 : vector<1x128xf32>
    %8 = vector.extract_strided_slice %4 {offsets = [2, 0], sizes = [1, 128], strides = [1, 1]} : vector<3x128xf32> to vector<1x128xf32>
    %9 = arith.addf %7, %8 : vector<1x128xf32>
    %cst = arith.constant 0.000000e+00 : f32
    %10 = vector.broadcast %cst : f32 to vector<1x128xf32>
    %11 = arith.cmpf one, %9, %10 : vector<1x128xf32>
    %12 = vector.extract_strided_slice %4 {offsets = [0, 0], sizes = [1, 128], strides = [1, 1]} : vector<3x128xf32> to vector<1x128xf32>
    %cst_3 = arith.constant 8.000000e+00 : f32
    %13 = vector.broadcast %cst_3 : f32 to vector<1x128xf32>
    %14 = arith.mulf %12, %13 : vector<1x128xf32>
    %cst_4 = arith.constant 1.800000e+01 : f32
    %15 = vector.broadcast %cst_4 : f32 to vector<1x128xf32>
    %16 = arith.select %11, %14, %15 : vector<1x128xi1>, vector<1x128xf32>
    %17 = tpu.iota {dimensions = array<i32: 0>} : vector<16x128xi32>
    %18 = arith.sitofp %17 : vector<16x128xi32> to vector<16x128xf32>
    %cst_5 = arith.constant -8.000000e+00 : f32
    %19 = vector.broadcast %cst_5 : f32 to vector<16x128xf32>
    %20 = arith.addf %18, %19 : vector<16x128xf32>
    %21 = vector.broadcast %16 : vector<1x128xf32> to vector<16x128xf32>
    %22 = arith.subf %21, %20 : vector<16x128xf32>
    %23 = math.absf %22 : vector<16x128xf32>
    %cst_6 = arith.constant 1.000000e+00 : f32
    %24 = vector.broadcast %cst_6 : f32 to vector<16x128xf32>
    %25 = arith.subf %24, %23 : vector<16x128xf32>
    %cst_7 = arith.constant 0.000000e+00 : f32
    %26 = vector.broadcast %cst_7 : f32 to vector<16x128xf32>
    %27 = arith.maximumf %25, %26 : vector<16x128xf32>
    %c0_8 = arith.constant 0 : index
    %c0_9 = arith.constant 0 : index
    %c0_10 = arith.constant 0 : index
    %28 = vector.load %arg5[%c0_8, %c0_9, %c0_10] : memref<1x128x3xf32, #tpu.memory_space<vmem>>, vector<1x128x3xf32>
    %29 = vector.shape_cast %28 : vector<1x128x3xf32> to vector<128x3xf32>
    %30 = vector.extract_strided_slice %29 {offsets = [0, 1], sizes = [128, 1], strides = [1, 1]} : vector<128x3xf32> to vector<128x1xf32>
    %cst_11 = arith.constant 8.000000e+00 : f32
    %31 = vector.broadcast %cst_11 : f32 to vector<128x1xf32>
    %32 = arith.mulf %30, %31 : vector<128x1xf32>
    %33 = vector.extract_strided_slice %29 {offsets = [0, 2], sizes = [128, 1], strides = [1, 1]} : vector<128x3xf32> to vector<128x1xf32>
    %cst_12 = arith.constant 8.000000e+00 : f32
    %34 = vector.broadcast %cst_12 : f32 to vector<128x1xf32>
    %35 = arith.mulf %33, %34 : vector<128x1xf32>
    %c0_13 = arith.constant 0 : index
    %c0_14 = arith.constant 0 : index
    %36 = vector.load %arg3[%c0_13, %c0_14] : memref<2x256xf32, #tpu.memory_space<vmem>>, vector<1x256xf32>
    %c1 = arith.constant 1 : index
    %c0_15 = arith.constant 0 : index
    %37 = vector.load %arg3[%c1, %c0_15] : memref<2x256xf32, #tpu.memory_space<vmem>>, vector<1x256xf32>
    %38 = vector.broadcast %32 : vector<128x1xf32> to vector<128x256xf32>
    %39 = vector.broadcast %36 : vector<1x256xf32> to vector<128x256xf32>
    %40 = arith.subf %38, %39 : vector<128x256xf32>
    %41 = math.absf %40 : vector<128x256xf32>
    %cst_16 = arith.constant 1.000000e+00 : f32
    %42 = vector.broadcast %cst_16 : f32 to vector<128x256xf32>
    %43 = arith.subf %42, %41 : vector<128x256xf32>
    %cst_17 = arith.constant 0.000000e+00 : f32
    %44 = vector.broadcast %cst_17 : f32 to vector<128x256xf32>
    %45 = arith.maximumf %43, %44 : vector<128x256xf32>
    %46 = vector.broadcast %35 : vector<128x1xf32> to vector<128x256xf32>
    %47 = vector.broadcast %37 : vector<1x256xf32> to vector<128x256xf32>
    %48 = arith.subf %46, %47 : vector<128x256xf32>
    %49 = math.absf %48 : vector<128x256xf32>
    %cst_18 = arith.constant 1.000000e+00 : f32
    %50 = vector.broadcast %cst_18 : f32 to vector<128x256xf32>
    %51 = arith.subf %50, %49 : vector<128x256xf32>
    %cst_19 = arith.constant 0.000000e+00 : f32
    %52 = vector.broadcast %cst_19 : f32 to vector<128x256xf32>
    %53 = arith.maximumf %51, %52 : vector<128x256xf32>
    %54 = arith.mulf %45, %53 : vector<128x256xf32>
    %c0_20 = arith.constant 0 : index
    %c0_21 = arith.constant 0 : index
    %c0_22 = arith.constant 0 : index
    %55 = vector.load %arg6[%c0_20, %c0_21, %c0_22] : memref<1x16x256xf32, #tpu.memory_space<vmem>>, vector<1x16x256xf32>
    %56 = vector.shape_cast %55 : vector<1x16x256xf32> to vector<16x256xf32>
    %cst_23 = arith.constant dense<0.000000e+00> : vector<16x256xf32>
    %57 = tpu.matmul %27, %54, %cst_23 {dimension_numbers = #tpu.dot_dimension_numbers<[1], [0], [0], [1], [0, 0, 1, 1], [], []>} : vector<16x128xf32>, vector<128x256xf32>, vector<16x256xf32> -> vector<16x256xf32>
    %58 = arith.addf %56, %57 : vector<16x256xf32>
    %c0_24 = arith.constant 0 : index
    %c0_25 = arith.constant 0 : index
    %c0_26 = arith.constant 0 : index
    %59 = vector.load %arg6[%c0_24, %c0_25, %c0_26] : memref<1x16x256xf32, #tpu.memory_space<vmem>>, vector<1x16x256xf32>
    %60 = vector.shape_cast %59 : vector<1x16x256xf32> to vector<16x256xf32>
    %61 = vector.shape_cast %58 : vector<16x256xf32> to vector<1x16x256xf32>
    tpu.vector_store %arg6[%c0_24, %c0_25, %c0_26], %61 {strides = array<i32>} : memref<1x16x256xf32, #tpu.memory_space<vmem>>, vector<1x16x256xf32>,
    return
  }
  func.func @transform_0(%arg0: i32, %arg1: i32, %arg2: i32) -> (i32, i32) {
    %c0_i32 = arith.constant 0 : i32
    %c0_i32_0 = arith.constant 0 : i32
    return %c0_i32, %arg1 : i32, i32
  }
  func.func @transform_1(%arg0: i32, %arg1: i32, %arg2: i32) -> (i32, i32, i32) {
    %c0_i32 = arith.constant 0 : i32
    %c0_i32_0 = arith.constant 0 : i32
    return %arg0, %c0_i32, %arg2 : i32, i32, i32
  }
  func.func @transform_2(%arg0: i32, %arg1: i32, %arg2: i32) -> (i32, i32, i32) {
    %c0_i32 = arith.constant 0 : i32
    %c0_i32_0 = arith.constant 0 : i32
    return %arg0, %arg2, %c0_i32 : i32, i32, i32
  }
  func.func @transform_3(%arg0: i32, %arg1: i32, %arg2: i32) -> (i32, i32, i32) {
    %c0_i32 = arith.constant 0 : i32
    %c0_i32_0 = arith.constant 0 : i32
    return %arg0, %c0_i32, %arg1 : i32, i32, i32
  }
}

</mosaic_0001>

<llo_original>
// kernel: tpu_custom_call.1
$region0: #{tpu_custom_call.1}
  #allocation0 [shape = 'u32[]', space=smem, size = 0x4, offset = 0x4, fixed_abs, tag = 'smem constant byte address 0x4 - core index']
  #allocation1 [shape = 'u32[144,128]{1,0:T(1,128)}', space=vmem, size = 0x12000, scoped, tag = 'internal scratch']
  %s0 = inlined_call_operand.vmem [shape: f32[2,256], index: 0, kind: input, shape index: {}]
  %s1 = inlined_call_operand.vmem [shape: f32[2,3,128], index: 1, kind: input, shape index: {}]
  %s2 = inlined_call_operand.vmem [shape: f32[2,128,3], index: 2, kind: input, shape index: {}]
  %s3 = inlined_call_operand.hbm [shape: f32[2,16,256], index: 3, kind: output, shape index: {}]
  %s4 = sld [smem:[#allocation0]]
  $region49: #{tpu_custom_call.1} parent=0
    _
  %s6 = ssub.s32 1, %s4
  %s7 = scalar_select 0, %s6, %s4
  $region1: #{tpu_custom_call.1} parent=0
    #allocation2 [shape = 'u8[32768]{0}', space=vmem, size = 0x8000, scoped, tag = 'output window, operand 0']
    #allocation3 [shape = 's32[2]{0}', space=sflag, size = 0x8, scoped, tag = 'scoped memory for tpu_custom_call.1']
    %8 = vsyncpa [#allocation3], 0
    %s9 = scalar_lea.sflag [#allocation3], 1
    %10 = vsyncpa %s9, 0
    loop: start=0, step=1, limit=4
    $region2: #{tpu_custom_call.1} parent=1 // loop_pre_header
      _
    $region3: #{tpu_custom_call.1} parent=1 // loop_header
      %s12 = sphi 0, %s16
      %p13 = scmp.ge.s32.totalorder %s12, 4
      %s19 = sphi 0, %s38
      %s20 = sphi 0, %s34
      %s21 = sphi 0, %s30
      %s22 = sphi 0, %s19
      %s23 = sphi 0, %s20
      %s24 = sphi 0, %s21
      %s25 = sphi 0, %s22
      %s26 = sphi 0, %s23
      %s27 = sphi 0, %s24
      %s41 = sphi 0, %s43
      %s44 = sphi 0, %s41
      %s45 = sphi 0, %s44
      %s61 = sphi 0, %s45
      %s69 = sphi 0, %s71
      %s72 = sphi 0, %s69
      %s73 = sphi 0, %s72
      %s89 = sphi 0, %s73
      %s97 = sphi 0, %s99
      %s100 = sphi 0, %s97
      %s101 = sphi 0, %s100
      %s117 = sphi 0, %s101
      %s125 = sphi 0, %s127
      %s128 = sphi 0, %s125
      %s129 = sphi 0, %s128
      %s145 = sphi 0, %s129
    $region4: #{tpu_custom_call.1} parent=1 // loop_header_branch
      %15 = sbr.rel (%p13) target = $region8
    $region5: #{tpu_custom_call.1} parent=1 // loop_body
      %s17 = ssub.s32 %s12, 1
      %s18 = ssub.s32 %s12, 2
      %s28 = sadd.s32 1, %s21
      %p29 = scmp.ge.s32.totalorder %s28, 1
      %s30 = scalar_select %p29, 0, %s28
      %s31 = sadd.s32 1, %s20
      %s32 = scalar_select %p29, %s31, %s20
      %p33 = scmp.ge.s32.totalorder %s32, 1
      %s34 = scalar_select %p33, 0, %s32
      %s35 = sadd.s32 1, %s19
      %s36 = scalar_select %p33, %s35, %s19
      %p37 = scmp.ge.s32.totalorder %s36, 2
      %s38 = scalar_select %p37, 0, %s36
      %s39 = ssub.s32 %s20, %s34
      %p40 = scmp.eq.s32.totalorder %s39, 0
      %s42 = sadd.s32 %s41, 1
      %s43 = scalar_select %p40, %s41, %s42
      %p46 = pneg %p40
      %p47 = scmp.eq.s32.totalorder %s12, 1
      %p48 = por %p46, %p47
      %p49 = scmp.ne.s32.totalorder %s41, %s44
      %p50 = scmp.eq.s32.totalorder %s12, 0
      %p51 = por %p49, %p50
      %p52 = scmp.ne.s32.totalorder %s41, %s44
      %p53 = scmp.eq.s32.totalorder %s17, 1
      %p54 = por %p52, %p53
      %p55 = scmp.ne.s32.totalorder %s44, %s45
      %p56 = scmp.eq.s32.totalorder %s17, 0
      %p57 = por %p55, %p56
      %p58 = scmp.ne.s32.totalorder %s44, %s45
      %p59 = scmp.eq.s32.totalorder %s18, 1
      %p60 = por %p58, %p59
      %p62 = scmp.ne.s32.totalorder %s45, %s61
      %p63 = scmp.eq.s32.totalorder %s18, 0
      %p64 = por %p62, %p63
      %s65 = ssub.s32 %s19, %s38
      %s66 = ssub.s32 %s21, %s30
      %s67 = sor.u32 %s65, %s66
      %p68 = scmp.eq.s32.totalorder %s67, 0
      %s70 = sadd.s32 %s69, 1
      %s71 = scalar_select %p68, %s69, %s70
      %p74 = pneg %p68
      %p75 = scmp.eq.s32.totalorder %s12, 1
      %p76 = por %p74, %p75
      %p77 = scmp.ne.s32.totalorder %s69, %s72
      %p78 = scmp.eq.s32.totalorder %s12, 0
      %p79 = por %p77, %p78
      %p80 = scmp.ne.s32.totalorder %s69, %s72
      %p81 = scmp.eq.s32.totalorder %s17, 1
      %p82 = por %p80, %p81
      %p83 = scmp.ne.s32.totalorder %s72, %s73
      %p84 = scmp.eq.s32.totalorder %s17, 0
      %p85 = por %p83, %p84
      %p86 = scmp.ne.s32.totalorder %s72, %s73
      %p87 = scmp.eq.s32.totalorder %s18, 1
      %p88 = por %p86, %p87
      %p90 = scmp.ne.s32.totalorder %s73, %s89
      %p91 = scmp.eq.s32.totalorder %s18, 0
      %p92 = por %p90, %p91
      %s93 = ssub.s32 %s19, %s38
      %s94 = ssub.s32 %s21, %s30
      %s95 = sor.u32 %s93, %s94
      %p96 = scmp.eq.s32.totalorder %s95, 0
      %s98 = sadd.s32 %s97, 1
      %s99 = scalar_select %p96, %s97, %s98
      %p102 = pneg %p96
      %p103 = scmp.eq.s32.totalorder %s12, 1
      %p104 = por %p102, %p103
      %p105 = scmp.ne.s32.totalorder %s97, %s100
      %p106 = scmp.eq.s32.totalorder %s12, 0
      %p107 = por %p105, %p106
      %p108 = scmp.ne.s32.totalorder %s97, %s100
      %p109 = scmp.eq.s32.totalorder %s17, 1
      %p110 = por %p108, %p109
      %p111 = scmp.ne.s32.totalorder %s100, %s101
      %p112 = scmp.eq.s32.totalorder %s17, 0
      %p113 = por %p111, %p112
      %p114 = scmp.ne.s32.totalorder %s100, %s101
      %p115 = scmp.eq.s32.totalorder %s18, 1
      %p116 = por %p114, %p115
      %p118 = scmp.ne.s32.totalorder %s101, %s117
      %p119 = scmp.eq.s32.totalorder %s18, 0
      %p120 = por %p118, %p119
      %s121 = ssub.s32 %s19, %s38
      %s122 = ssub.s32 %s20, %s34
      %s123 = sor.u32 %s121, %s122
      %p124 = scmp.eq.s32.totalorder %s123, 0
      %s126 = sadd.s32 %s125, 1
      %s127 = scalar_select %p124, %s125, %s126
      %p130 = pneg %p124
      %p131 = scmp.eq.s32.totalorder %s12, 1
      %p132 = por %p130, %p131
      %p133 = scmp.ne.s32.totalorder %s125, %s128
      %p134 = scmp.eq.s32.totalorder %s12, 0
      %p135 = por %p133, %p134
      %p136 = scmp.ne.s32.totalorder %s125, %s128
      %p137 = scmp.eq.s32.totalorder %s17, 1
      %p138 = por %p136, %p137
      %p139 = scmp.ne.s32.totalorder %s128, %s129
      %p140 = scmp.eq.s32.totalorder %s17, 0
      %p141 = por %p139, %p140
      %p142 = scmp.ne.s32.totalorder %s128, %s129
      %p143 = scmp.eq.s32.totalorder %s18, 1
      %p144 = por %p142, %p143
      %p146 = scmp.ne.s32.totalorder %s129, %s145
      %p147 = scmp.eq.s32.totalorder %s18, 0
      %p148 = por %p146, %p147
      %p149 = scmp.le.s32.totalorder 1, %s12
      %p150 = scmp.lt.s32.totalorder %s12, 3
      %p151 = pnand %p149, %p150
      %p152 = pneg %p151
      // Predicated region
      $region9: #{tpu_custom_call.1} parent=5 // pred_check
        _
      $region10: #{tpu_custom_call.1} parent=5 // pred_check_branch
        %154 = sbr.rel (%p151) target = $region12
      $region11: #{tpu_custom_call.1} parent=5 // pred_region
        %s155 = ssub.s32 %s12, 1
        // Predicated region
        $region13: #{tpu_custom_call.1} parent=11 // pred_check
          %p156 = pneg %p57
        $region14: #{tpu_custom_call.1} parent=11 // pred_check_branch
          %158 = sbr.rel (%p156) target = $region16
        $region15: #{tpu_custom_call.1} parent=11 // pred_region
          %s159 = smul.u32 2, %s23
          %p160 = scmp.lt.s32.totalorder %s159, 1
          %s161 = scalar_select %p160, %s159, 1
          %s162 = smul.addr %s161, 2
          %s163 = scalar_lea.vmem %s0, %s162
          %s164 = smul.u32 2, %s23
        $region16: #{tpu_custom_call.1} parent=11 // pred_fallthru
          _
      $region12: #{tpu_custom_call.1} parent=5 // pred_fallthru
        _
      %p165 = scmp.lt.s32.totalorder %s12, 2
      // Predicated region
      $region17: #{tpu_custom_call.1} parent=5 // pred_check
        %p166 = pneg %p165
      $region18: #{tpu_custom_call.1} parent=5 // pred_check_branch
        %168 = sbr.rel (%p166) target = $region20
      $region19: #{tpu_custom_call.1} parent=5 // pred_region
        // Predicated region
        $region21: #{tpu_custom_call.1} parent=19 // pred_check
          %p169 = pneg %p79
        $region22: #{tpu_custom_call.1} parent=19 // pred_check_branch
          %171 = sbr.rel (%p169) target = $region24
        $region23: #{tpu_custom_call.1} parent=19 // pred_region
          %p172 = scmp.lt.s32.totalorder %s19, 1
          %s173 = scalar_select %p172, %s19, 1
          %p174 = scmp.lt.s32.totalorder %s21, 0
          %s175 = scalar_select %p174, %s21, 0
          %s176 = sadd.s32 %s175, %s173
          %s177 = smul.addr %s176, 4
          %s178 = scalar_lea.vmem %s1, %s177
        $region24: #{tpu_custom_call.1} parent=19 // pred_fallthru
          _
        // Predicated region
        $region25: #{tpu_custom_call.1} parent=19 // pred_check
          %p179 = pneg %p107
        $region26: #{tpu_custom_call.1} parent=19 // pred_check_branch
          %181 = sbr.rel (%p179) target = $region28
        $region27: #{tpu_custom_call.1} parent=19 // pred_region
          %s182 = smul.u32 16, %s21
          %p183 = scmp.lt.s32.totalorder %s19, 1
          %s184 = scalar_select %p183, %s19, 1
          %p185 = scmp.lt.s32.totalorder %s182, 15
          %s186 = scalar_select %p185, %s182, 15
          %s187 = smul.addr %s184, 16
          %s188 = sadd.s32 %s186, %s187
          %s189 = smul.addr %s188, 8
          %s190 = scalar_lea.vmem %s2, %s189
          %s191 = smul.u32 16, %s21
        $region28: #{tpu_custom_call.1} parent=19 // pred_fallthru
          _
      $region20: #{tpu_custom_call.1} parent=5 // pred_fallthru
        _
      %p192 = scmp.le.s32.totalorder 1, %s12
      %p193 = scmp.lt.s32.totalorder %s12, 3
      %p194 = pnand %p192, %p193
      %p195 = pneg %p194
      // Predicated region
      $region29: #{tpu_custom_call.1} parent=5 // pred_check
        _
      $region30: #{tpu_custom_call.1} parent=5 // pred_check_branch
        %197 = sbr.rel (%p194) target = $region32
      $region31: #{tpu_custom_call.1} parent=5 // pred_region
        %s198 = ssub.s32 %s12, 1
        %s199 = smul.u32 2, %s23
        %p200 = scmp.lt.s32.totalorder %s199, 1
        %s201 = scalar_select %p200, %s199, 1
        %s202 = smul.addr %s201, 2
        %s203 = scalar_lea.vmem %s0, %s202
        %p204 = pneg %p57
        %p205 = pneg %p54
        %p206 = scmp.lt.s32.totalorder %s22, 1
        %s207 = scalar_select %p206, %s22, 1
        %p208 = scmp.lt.s32.totalorder %s24, 0
        %s209 = scalar_select %p208, %s24, 0
        %s210 = sadd.s32 %s209, %s207
        %s211 = smul.addr %s210, 4
        %s212 = scalar_lea.vmem %s1, %s211
        %p213 = pneg %p85
        %p214 = pneg %p82
        %s215 = smul.u32 16, %s24
        %p216 = scmp.lt.s32.totalorder %s22, 1
        %s217 = scalar_select %p216, %s22, 1
        %p218 = scmp.lt.s32.totalorder %s215, 15
        %s219 = scalar_select %p218, %s215, 15
        %s220 = smul.addr %s217, 16
        %s221 = sadd.s32 %s219, %s220
        %s222 = smul.addr %s221, 8
        %s223 = scalar_lea.vmem %s2, %s222
        %p224 = pneg %p113
        %p225 = pneg %p110
        %p226 = pneg %p141
        %p227 = pneg %p138
        %s228 = sand.u32 %s128, 1
        %s229 = scalar_lea.sflag [#allocation3], %s228
        %s230 = sand.u32 %s128, 1
        %s231 = smul.addr %s230, 32
        %s232 = scalar_lea.vmem [#allocation2], %s231
        %s233 = smul.u32 2, %s23
        %p234 = scmp.lt.s32.totalorder %s233, 1
        %s235 = scalar_select %p234, %s233, 1
        %s236 = smul.addr %s235, 2
        %s237 = scalar_lea.vmem %s0, %s236
        %s238 = smul.u32 2, %s23
        %p239 = scmp.lt.s32.totalorder %s22, 1
        %s240 = scalar_select %p239, %s22, 1
        %p241 = scmp.lt.s32.totalorder %s24, 0
        %s242 = scalar_select %p241, %s24, 0
        %s243 = sadd.s32 %s242, %s240
        %s244 = smul.addr %s243, 4
        %s245 = scalar_lea.vmem %s1, %s244
        %s246 = smul.u32 16, %s24
        %p247 = scmp.lt.s32.totalorder %s22, 1
        %s248 = scalar_select %p247, %s22, 1
        %p249 = scmp.lt.s32.totalorder %s246, 15
        %s250 = scalar_select %p249, %s246, 15
        %s251 = smul.addr %s248, 16
        %s252 = sadd.s32 %s250, %s251
        %s253 = smul.addr %s252, 8
        %s254 = scalar_lea.vmem %s2, %s253
        %s255 = smul.u32 16, %s24
        %s256 = smul.u32 2, %s23
        %p257 = scmp.eq.s32.totalorder %s24, 0
        // Predicated region
        $region33: #{tpu_custom_call.1} parent=31 // pred_check
          %p258 = pneg %p257
        $region34: #{tpu_custom_call.1} parent=31 // pred_check_branch
          %260 = sbr.rel (%p258) target = $region36
        $region35: #{tpu_custom_call.1} parent=31 // pred_region
          %261 = vst [vmem:[%s232] sm:$0xff] 0.0
          %262 = vst [vmem:[%s232 + $0x8] sm:$0xff] 0.0
          %263 = vst [vmem:[%s232 + $0x10] sm:$0xff] 0.0
          %264 = vst [vmem:[%s232 + $0x18] sm:$0xff] 0.0
        $region36: #{tpu_custom_call.1} parent=31 // pred_fallthru
          _
        %v265 = vld [vmem:[%s245] sm:$0x7]
        %v267 = vrot.slane %v265, 1
        %v269 = vadd.f32 %v265, %v267
        %v270 = vrot.slane %v265, 2
        %v272 = vadd.f32 %v269, %v270
        %vm273 = vcmp.ne.f32.partialorder %v272, 0.0
        %v274 = vmul.f32 %v265, 8.0
        %v275 = vsel %vm273, %v274, 18.0
        %v276 = vlaneseq
        %v277 = vshrl.u32 %v276, 7
        %v278 = vadd.s32 %v277, 8
        %v279 = vcvt.s32.f32 %v277
        %v280 = vcvt.s32.f32 %v278
        %v281 = vadd.f32 %v279, -8.0
        %v282 = vadd.f32 %v280, -8.0
        %v283 = vlaneseq
        %v284 = vshrl.u32 %v283, 7
        %v285 = vsub.s32 0, %v284
        %v286 = vrot.slane %v275, %v285
        %v287 = vsub.f32 %v286, %v281
        %v288 = vsub.f32 %v286, %v282
        %v289 = vand.u32 2147483647, %v287
        %v290 = vand.u32 2147483647, %v288
        %v291 = vsub.f32 1.0, %v289
        %v292 = vsub.f32 1.0, %v290
        %v293 = vmax.f32 %v291, 0.0
        %v294 = vmax.f32 %v292, 0.0
        %v295 = vld [vmem:[%s254] sm:$0xff]
        %v296 = vld [vmem:[%s254 + $0x8] sm:$0xff]
        %v297 = vld [vmem:[%s254 + $0x10] sm:$0xff]
        %v298 = vld [vmem:[%s254 + $0x18] sm:$0xff]
        %v299 = vld [vmem:[%s254 + $0x20] sm:$0xff]
        %v300 = vld [vmem:[%s254 + $0x28] sm:$0xff]
        %v301 = vld [vmem:[%s254 + $0x30] sm:$0xff]
        %v302 = vld [vmem:[%s254 + $0x38] sm:$0xff]
        %v303 = vld [vmem:[%s254 + $0x40] sm:$0xff]
        %v304 = vld [vmem:[%s254 + $0x48] sm:$0xff]
        %v305 = vld [vmem:[%s254 + $0x50] sm:$0xff]
        %v306 = vld [vmem:[%s254 + $0x58] sm:$0xff]
        %v307 = vld [vmem:[%s254 + $0x60] sm:$0xff]
        %v308 = vld [vmem:[%s254 + $0x68] sm:$0xff]
        %v309 = vld [vmem:[%s254 + $0x70] sm:$0xff]
        %v310 = vld [vmem:[%s254 + $0x78] sm:$0xff]
        %v311 = vmul.f32 %v295, 8.0
        %v312 = vmul.f32 %v296, 8.0
        %v313 = vmul.f32 %v297, 8.0
        %v314 = vmul.f32 %v298, 8.0
        %v315 = vmul.f32 %v299, 8.0
        %v316 = vmul.f32 %v300, 8.0
        %v317 = vmul.f32 %v301, 8.0
        %v318 = vmul.f32 %v302, 8.0
        %v319 = vmul.f32 %v303, 8.0
        %v320 = vmul.f32 %v304, 8.0
        %v321 = vmul.f32 %v305, 8.0
        %v322 = vmul.f32 %v306, 8.0
        %v323 = vmul.f32 %v307, 8.0
        %v324 = vmul.f32 %v308, 8.0
        %v325 = vmul.f32 %v309, 8.0
        %v326 = vmul.f32 %v310, 8.0
        %v327 = vld [vmem:[%s237] ss:$2 sm:$0x3]
        %s328 = scalar_lea.vmem %s237, 1
        %v329 = vld [vmem:[%s328] ss:$2 sm:$0x3]
        %331 = vset.pattern.permute.xlu0 1
        %332 = vperm.xlu0 %331, %v311
        %v333 = vpop.permute.xlu0 %332
        %336 = vset.pattern.permute.xlu0 1
        %337 = vperm.xlu0 %336, %v312
        %v338 = vpop.permute.xlu0 %337
        %341 = vset.pattern.permute.xlu0 1
        %342 = vperm.xlu0 %341, %v313
        %v343 = vpop.permute.xlu0 %342
        %346 = vset.pattern.permute.xlu0 1
        %347 = vperm.xlu0 %346, %v314
        %v348 = vpop.permute.xlu0 %347
        %351 = vset.pattern.permute.xlu0 1
        %352 = vperm.xlu0 %351, %v315
        %v353 = vpop.permute.xlu0 %352
        %356 = vset.pattern.permute.xlu0 1
        %357 = vperm.xlu0 %356, %v316
        %v358 = vpop.permute.xlu0 %357
        %361 = vset.pattern.permute.xlu0 1
        %362 = vperm.xlu0 %361, %v317
        %v363 = vpop.permute.xlu0 %362
        %366 = vset.pattern.permute.xlu0 1
        %367 = vperm.xlu0 %366, %v318
        %v368 = vpop.permute.xlu0 %367
        %371 = vset.pattern.permute.xlu0 1
        %372 = vperm.xlu0 %371, %v319
        %v373 = vpop.permute.xlu0 %372
        %376 = vset.pattern.permute.xlu0 1
        %377 = vperm.xlu0 %376, %v320
        %v378 = vpop.permute.xlu0 %377
        %381 = vset.pattern.permute.xlu0 1
        %382 = vperm.xlu0 %381, %v321
        %v383 = vpop.permute.xlu0 %382
        %386 = vset.pattern.permute.xlu0 1
        %387 = vperm.xlu0 %386, %v322
        %v388 = vpop.permute.xlu0 %387
        %391 = vset.pattern.permute.xlu0 1
        %392 = vperm.xlu0 %391, %v323
        %v393 = vpop.permute.xlu0 %392
        %396 = vset.pattern.permute.xlu0 1
        %397 = vperm.xlu0 %396, %v324
        %v398 = vpop.permute.xlu0 %397
        %401 = vset.pattern.permute.xlu0 1
        %402 = vperm.xlu0 %401, %v325
        %v403 = vpop.permute.xlu0 %402
        %406 = vset.pattern.permute.xlu0 1
        %407 = vperm.xlu0 %406, %v326
        %v408 = vpop.permute.xlu0 %407
        %v411 = vlaneseq
        %v412 = vshrl.u32 %v411, 7
        %v413 = vsub.s32 0, %v412
        %v414 = vrot.slane %v327, %v413
        %v415 = vlaneseq
        %v416 = vshrl.u32 %v415, 7
        %v417 = vsub.s32 1, %v416
        %v418 = vrot.slane %v327, %v417
        %v421 = vsub.f32 %v333, %v414
        %v422 = vsub.f32 %v333, %v418
        %v423 = vsub.f32 %v338, %v414
        %v424 = vsub.f32 %v338, %v418
        %v425 = vsub.f32 %v343, %v414
        %v426 = vsub.f32 %v343, %v418
        %v427 = vsub.f32 %v348, %v414
        %v428 = vsub.f32 %v348, %v418
        %v429 = vsub.f32 %v353, %v414
        %v430 = vsub.f32 %v353, %v418
        %v431 = vsub.f32 %v358, %v414
        %v432 = vsub.f32 %v358, %v418
        %v433 = vsub.f32 %v363, %v414
        %v434 = vsub.f32 %v363, %v418
        %v435 = vsub.f32 %v368, %v414
        %v436 = vsub.f32 %v368, %v418
        %v437 = vsub.f32 %v373, %v414
        %v438 = vsub.f32 %v373, %v418
        %v439 = vsub.f32 %v378, %v414
        %v440 = vsub.f32 %v378, %v418
        %v441 = vsub.f32 %v383, %v414
        %v442 = vsub.f32 %v383, %v418
        %v443 = vsub.f32 %v388, %v414
        %v444 = vsub.f32 %v388, %v418
        %v445 = vsub.f32 %v393, %v414
        %v446 = vsub.f32 %v393, %v418
        %v447 = vsub.f32 %v398, %v414
        %v448 = vsub.f32 %v398, %v418
        %v449 = vsub.f32 %v403, %v414
        %v450 = vsub.f32 %v403, %v418
        %v451 = vsub.f32 %v408, %v414
        %v452 = vsub.f32 %v408, %v418
        %v453 = vand.u32 2147483647, %v421
        %v454 = vand.u32 2147483647, %v422
        %v455 = vand.u32 2147483647, %v423
        %v456 = vand.u32 2147483647, %v424
        %v457 = vand.u32 2147483647, %v425
        %v458 = vand.u32 2147483647, %v426
        %v459 = vand.u32 2147483647, %v427
        %v460 = vand.u32 2147483647, %v428
        %v461 = vand.u32 2147483647, %v429
        %v462 = vand.u32 2147483647, %v430
        %v463 = vand.u32 2147483647, %v431
        %v464 = vand.u32 2147483647, %v432
        %v465 = vand.u32 2147483647, %v433
        %v466 = vand.u32 2147483647, %v434
        %v467 = vand.u32 2147483647, %v435
        %v468 = vand.u32 2147483647, %v436
        %v469 = vand.u32 2147483647, %v437
        %v470 = vand.u32 2147483647, %v438
        %v471 = vand.u32 2147483647, %v439
        %v472 = vand.u32 2147483647, %v440
        %v473 = vand.u32 2147483647, %v441
        %v474 = vand.u32 2147483647, %v442
        %v475 = vand.u32 2147483647, %v443
        %v476 = vand.u32 2147483647, %v444
        %v477 = vand.u32 2147483647, %v445
        %v478 = vand.u32 2147483647, %v446
        %v479 = vand.u32 2147483647, %v447
        %v480 = vand.u32 2147483647, %v448
        %v481 = vand.u32 2147483647, %v449
        %v482 = vand.u32 2147483647, %v450
        %v483 = vand.u32 2147483647, %v451
        %v484 = vand.u32 2147483647, %v452
        %v485 = vsub.f32 1.0, %v453
        %v486 = vsub.f32 1.0, %v454
        %v487 = vsub.f32 1.0, %v455
        %v488 = vsub.f32 1.0, %v456
        %v489 = vsub.f32 1.0, %v457
        %v490 = vsub.f32 1.0, %v458
        %v491 = vsub.f32 1.0, %v459
        %v492 = vsub.f32 1.0, %v460
        %v493 = vsub.f32 1.0, %v461
        %v494 = vsub.f32 1.0, %v462
        %v495 = vsub.f32 1.0, %v463
        %v496 = vsub.f32 1.0, %v464
        %v497 = vsub.f32 1.0, %v465
        %v498 = vsub.f32 1.0, %v466
        %v499 = vsub.f32 1.0, %v467
        %v500 = vsub.f32 1.0, %v468
        %v501 = vsub.f32 1.0, %v469
        %v502 = vsub.f32 1.0, %v470
        %v503 = vsub.f32 1.0, %v471
        %v504 = vsub.f32 1.0, %v472
        %v505 = vsub.f32 1.0, %v473
        %v506 = vsub.f32 1.0, %v474
        %v507 = vsub.f32 1.0, %v475
        %v508 = vsub.f32 1.0, %v476
        %v509 = vsub.f32 1.0, %v477
        %v510 = vsub.f32 1.0, %v478
        %v511 = vsub.f32 1.0, %v479
        %v512 = vsub.f32 1.0, %v480
        %v513 = vsub.f32 1.0, %v481
        %v514 = vsub.f32 1.0, %v482
        %v515 = vsub.f32 1.0, %v483
        %v516 = vsub.f32 1.0, %v484
        %v517 = vmax.f32 %v485, 0.0
        %v518 = vmax.f32 %v486, 0.0
        %v519 = vmax.f32 %v487, 0.0
        %v520 = vmax.f32 %v488, 0.0
        %v521 = vmax.f32 %v489, 0.0
        %v522 = vmax.f32 %v490, 0.0
        %v523 = vmax.f32 %v491, 0.0
        %v524 = vmax.f32 %v492, 0.0
        %v525 = vmax.f32 %v493, 0.0
        %v526 = vmax.f32 %v494, 0.0
        %v527 = vmax.f32 %v495, 0.0
        %v528 = vmax.f32 %v496, 0.0
        %v529 = vmax.f32 %v497, 0.0
        %v530 = vmax.f32 %v498, 0.0
        %v531 = vmax.f32 %v499, 0.0
        %v532 = vmax.f32 %v500, 0.0
        %v533 = vmax.f32 %v501, 0.0
        %v534 = vmax.f32 %v502, 0.0
        %v535 = vmax.f32 %v503, 0.0
        %v536 = vmax.f32 %v504, 0.0
        %v537 = vmax.f32 %v505, 0.0
        %v538 = vmax.f32 %v506, 0.0
        %v539 = vmax.f32 %v507, 0.0
        %v540 = vmax.f32 %v508, 0.0
        %v541 = vmax.f32 %v509, 0.0
        %v542 = vmax.f32 %v510, 0.0
        %v543 = vmax.f32 %v511, 0.0
        %v544 = vmax.f32 %v512, 0.0
        %v545 = vmax.f32 %v513, 0.0
        %v546 = vmax.f32 %v514, 0.0
        %v547 = vmax.f32 %v515, 0.0
        %v548 = vmax.f32 %v516, 0.0
        %549 = vset.pattern.permute.xlu0 2
        %550 = vperm.xlu0 %549, %v311
        %v551 = vpop.permute.xlu0 %550
        %553 = vset.pattern.permute.xlu0 2
        %554 = vperm.xlu0 %553, %v312
        %v555 = vpop.permute.xlu0 %554
        %557 = vset.pattern.permute.xlu0 2
        %558 = vperm.xlu0 %557, %v313
        %v559 = vpop.permute.xlu0 %558
        %561 = vset.pattern.permute.xlu0 2
        %562 = vperm.xlu0 %561, %v314
        %v563 = vpop.permute.xlu0 %562
        %565 = vset.pattern.permute.xlu0 2
        %566 = vperm.xlu0 %565, %v315
        %v567 = vpop.permute.xlu0 %566
        %569 = vset.pattern.permute.xlu0 2
        %570 = vperm.xlu0 %569, %v316
        %v571 = vpop.permute.xlu0 %570
        %573 = vset.pattern.permute.xlu0 2
        %574 = vperm.xlu0 %573, %v317
        %v575 = vpop.permute.xlu0 %574
        %577 = vset.pattern.permute.xlu0 2
        %578 = vperm.xlu0 %577, %v318
        %v579 = vpop.permute.xlu0 %578
        %581 = vset.pattern.permute.xlu0 2
        %582 = vperm.xlu0 %581, %v319
        %v583 = vpop.permute.xlu0 %582
        %585 = vset.pattern.permute.xlu0 2
        %586 = vperm.xlu0 %585, %v320
        %v587 = vpop.permute.xlu0 %586
        %589 = vset.pattern.permute.xlu0 2
        %590 = vperm.xlu0 %589, %v321
        %v591 = vpop.permute.xlu0 %590
        %593 = vset.pattern.permute.xlu0 2
        %594 = vperm.xlu0 %593, %v322
        %v595 = vpop.permute.xlu0 %594
        %597 = vset.pattern.permute.xlu0 2
        %598 = vperm.xlu0 %597, %v323
        %v599 = vpop.permute.xlu0 %598
        %601 = vset.pattern.permute.xlu0 2
        %602 = vperm.xlu0 %601, %v324
        %v603 = vpop.permute.xlu0 %602
        %605 = vset.pattern.permute.xlu0 2
        %606 = vperm.xlu0 %605, %v325
        %v607 = vpop.permute.xlu0 %606
        %609 = vset.pattern.permute.xlu0 2
        %610 = vperm.xlu0 %609, %v326
        %v611 = vpop.permute.xlu0 %610
        %v614 = vlaneseq
        %v615 = vshrl.u32 %v614, 7
        %v616 = vsub.s32 0, %v615
        %v617 = vrot.slane %v329, %v616
        %v618 = vlaneseq
        %v619 = vshrl.u32 %v618, 7
        %v620 = vsub.s32 1, %v619
        %v621 = vrot.slane %v329, %v620
        %v624 = vsub.f32 %v551, %v617
        %v625 = vsub.f32 %v551, %v621
        %v626 = vsub.f32 %v555, %v617
        %v627 = vsub.f32 %v555, %v621
        %v628 = vsub.f32 %v559, %v617
        %v629 = vsub.f32 %v559, %v621
        %v630 = vsub.f32 %v563, %v617
        %v631 = vsub.f32 %v563, %v621
        %v632 = vsub.f32 %v567, %v617
        %v633 = vsub.f32 %v567, %v621
        %v634 = vsub.f32 %v571, %v617
        %v635 = vsub.f32 %v571, %v621
        %v636 = vsub.f32 %v575, %v617
        %v637 = vsub.f32 %v575, %v621
        %v638 = vsub.f32 %v579, %v617
        %v639 = vsub.f32 %v579, %v621
        %v640 = vsub.f32 %v583, %v617
        %v641 = vsub.f32 %v583, %v621
        %v642 = vsub.f32 %v587, %v617
        %v643 = vsub.f32 %v587, %v621
        %v644 = vsub.f32 %v591, %v617
        %v645 = vsub.f32 %v591, %v621
        %v646 = vsub.f32 %v595, %v617
        %v647 = vsub.f32 %v595, %v621
        %v648 = vsub.f32 %v599, %v617
        %v649 = vsub.f32 %v599, %v621
        %v650 = vsub.f32 %v603, %v617
        %v651 = vsub.f32 %v603, %v621
        %v652 = vsub.f32 %v607, %v617
        %v653 = vsub.f32 %v607, %v621
        %v654 = vsub.f32 %v611, %v617
        %v655 = vsub.f32 %v611, %v621
        %v656 = vand.u32 2147483647, %v624
        %v657 = vand.u32 2147483647, %v625
        %v658 = vand.u32 2147483647, %v626
        %v659 = vand.u32 2147483647, %v627
        %v660 = vand.u32 2147483647, %v628
        %v661 = vand.u32 2147483647, %v629
        %v662 = vand.u32 2147483647, %v630
        %v663 = vand.u32 2147483647, %v631
        %v664 = vand.u32 2147483647, %v632
        %v665 = vand.u32 2147483647, %v633
        %v666 = vand.u32 2147483647, %v634
        %v667 = vand.u32 2147483647, %v635
        %v668 = vand.u32 2147483647, %v636
        %v669 = vand.u32 2147483647, %v637
        %v670 = vand.u32 2147483647, %v638
        %v671 = vand.u32 2147483647, %v639
        %v672 = vand.u32 2147483647, %v640
        %v673 = vand.u32 2147483647, %v641
        %v674 = vand.u32 2147483647, %v642
        %v675 = vand.u32 2147483647, %v643
        %v676 = vand.u32 2147483647, %v644
        %v677 = vand.u32 2147483647, %v645
        %v678 = vand.u32 2147483647, %v646
        %v679 = vand.u32 2147483647, %v647
        %v680 = vand.u32 2147483647, %v648
        %v681 = vand.u32 2147483647, %v649
        %v682 = vand.u32 2147483647, %v650
        %v683 = vand.u32 2147483647, %v651
        %v684 = vand.u32 2147483647, %v652
        %v685 = vand.u32 2147483647, %v653
        %v686 = vand.u32 2147483647, %v654
        %v687 = vand.u32 2147483647, %v655
        %v688 = vsub.f32 1.0, %v656
        %v689 = vsub.f32 1.0, %v657
        %v690 = vsub.f32 1.0, %v658
        %v691 = vsub.f32 1.0, %v659
        %v692 = vsub.f32 1.0, %v660
        %v693 = vsub.f32 1.0, %v661
        %v694 = vsub.f32 1.0, %v662
        %v695 = vsub.f32 1.0, %v663
        %v696 = vsub.f32 1.0, %v664
        %v697 = vsub.f32 1.0, %v665
        %v698 = vsub.f32 1.0, %v666
        %v699 = vsub.f32 1.0, %v667
        %v700 = vsub.f32 1.0, %v668
        %v701 = vsub.f32 1.0, %v669
        %v702 = vsub.f32 1.0, %v670
        %v703 = vsub.f32 1.0, %v671
        %v704 = vsub.f32 1.0, %v672
        %v705 = vsub.f32 1.0, %v673
        %v706 = vsub.f32 1.0, %v674
        %v707 = vsub.f32 1.0, %v675
        %v708 = vsub.f32 1.0, %v676
        %v709 = vsub.f32 1.0, %v677
        %v710 = vsub.f32 1.0, %v678
        %v711 = vsub.f32 1.0, %v679
        %v712 = vsub.f32 1.0, %v680
        %v713 = vsub.f32 1.0, %v681
        %v714 = vsub.f32 1.0, %v682
        %v715 = vsub.f32 1.0, %v683
        %v716 = vsub.f32 1.0, %v684
        %v717 = vsub.f32 1.0, %v685
        %v718 = vsub.f32 1.0, %v686
        %v719 = vsub.f32 1.0, %v687
        %v720 = vmax.f32 %v688, 0.0
        %v721 = vmax.f32 %v689, 0.0
        %v722 = vmax.f32 %v690, 0.0
        %v723 = vmax.f32 %v691, 0.0
        %v724 = vmax.f32 %v692, 0.0
        %v725 = vmax.f32 %v693, 0.0
        %v726 = vmax.f32 %v694, 0.0
        %v727 = vmax.f32 %v695, 0.0
        %v728 = vmax.f32 %v696, 0.0
        %v729 = vmax.f32 %v697, 0.0
        %v730 = vmax.f32 %v698, 0.0
        %v731 = vmax.f32 %v699, 0.0
        %v732 = vmax.f32 %v700, 0.0
        %v733 = vmax.f32 %v701, 0.0
        %v734 = vmax.f32 %v702, 0.0
        %v735 = vmax.f32 %v703, 0.0
        %v736 = vmax.f32 %v704, 0.0
        %v737 = vmax.f32 %v705, 0.0
        %v738 = vmax.f32 %v706, 0.0
        %v739 = vmax.f32 %v707, 0.0
        %v740 = vmax.f32 %v708, 0.0
        %v741 = vmax.f32 %v709, 0.0
        %v742 = vmax.f32 %v710, 0.0
        %v743 = vmax.f32 %v711, 0.0
        %v744 = vmax.f32 %v712, 0.0
        %v745 = vmax.f32 %v713, 0.0
        %v746 = vmax.f32 %v714, 0.0
        %v747 = vmax.f32 %v715, 0.0
        %v748 = vmax.f32 %v716, 0.0
        %v749 = vmax.f32 %v717, 0.0
        %v750 = vmax.f32 %v718, 0.0
        %v751 = vmax.f32 %v719, 0.0
        %v752 = vmul.f32 %v517, %v720
        %v753 = vmul.f32 %v518, %v721
        %v754 = vmul.f32 %v519, %v722
        %v755 = vmul.f32 %v520, %v723
        %v756 = vmul.f32 %v521, %v724
        %v757 = vmul.f32 %v522, %v725
        %v758 = vmul.f32 %v523, %v726
        %v759 = vmul.f32 %v524, %v727
        %v760 = vmul.f32 %v525, %v728
        %v761 = vmul.f32 %v526, %v729
        %v762 = vmul.f32 %v527, %v730
        %v763 = vmul.f32 %v528, %v731
        %v764 = vmul.f32 %v529, %v732
        %v765 = vmul.f32 %v530, %v733
        %v766 = vmul.f32 %v531, %v734
        %v767 = vmul.f32 %v532, %v735
        %v768 = vmul.f32 %v533, %v736
        %v769 = vmul.f32 %v534, %v737
        %v770 = vmul.f32 %v535, %v738
        %v771 = vmul.f32 %v536, %v739
        %v772 = vmul.f32 %v537, %v740
        %v773 = vmul.f32 %v538, %v741
        %v774 = vmul.f32 %v539, %v742
        %v775 = vmul.f32 %v540, %v743
        %v776 = vmul.f32 %v541, %v744
        %v777 = vmul.f32 %v542, %v745
        %v778 = vmul.f32 %v543, %v746
        %v779 = vmul.f32 %v544, %v747
        %v780 = vmul.f32 %v545, %v748
        %v781 = vmul.f32 %v546, %v749
        %v782 = vmul.f32 %v547, %v750
        %v783 = vmul.f32 %v548, %v751
        %v784 = vld [vmem:[%s232] sm:$0xff]
        %v785 = vld [vmem:[%s232 + $0x8] sm:$0xff]
        %v786 = vld [vmem:[%s232 + $0x10] sm:$0xff]
        %v787 = vld [vmem:[%s232 + $0x18] sm:$0xff]
        %788 = vmatprep.subr.mxu0 %v783
        %789 = vmatpush1.msra.mxu0 %v782
        %790 = vmatprep.subr.mxu0 %v781
        %791 = vmatpush1.msra.mxu0 %v780
        %792 = vmatprep.subr.mxu0 %v779
        %793 = vmatpush1.msra.mxu0 %v778
        %794 = vmatprep.subr.mxu0 %v777
        %795 = vmatpush1.msra.mxu0 %v776
        %796 = vmatprep.subr.mxu0 %v775
        %797 = vmatpush1.msra.mxu0 %v774
        %798 = vmatprep.subr.mxu0 %v773
        %799 = vmatpush1.msra.mxu0 %v772
        %800 = vmatprep.subr.mxu0 %v771
        %801 = vmatpush1.msra.mxu0 %v770
        %802 = vmatprep.subr.mxu0 %v769
        %803 = vmatpush1.msra.mxu0 %v768
        %804 = vmatprep.subr.mxu0 %v767
        %805 = vmatpush1.msra.mxu0 %v766
        %806 = vmatprep.subr.mxu0 %v765
        %807 = vmatpush1.msra.mxu0 %v764
        %808 = vmatprep.subr.mxu0 %v763
        %809 = vmatpush1.msra.mxu0 %v762
        %810 = vmatprep.subr.mxu0 %v761
        %811 = vmatpush1.msra.mxu0 %v760
        %812 = vmatprep.subr.mxu0 %v759
        %813 = vmatpush1.msra.mxu0 %v758
        %814 = vmatprep.subr.mxu0 %v757
        %815 = vmatpush1.msra.mxu0 %v756
        %816 = vmatprep.subr.mxu0 %v755
        %817 = vmatpush1.msra.mxu0 %v754
        %818 = vmatprep.subr.mxu0 %v753
        %819 = vmatpush1.msra.mxu0 %v752
        %820 = vmatprep.subr.mxu0 0.0
        %821 = vmatpush2.msra.mxu0 0.0
        %822 = vmatprep.subr.mxu0 0.0
        %823 = vmatpush2.msra.mxu0 0.0
        %824 = vmatprep.subr.mxu0 0.0
        %825 = vmatpush2.msra.mxu0 0.0
        %826 = vmatprep.subr.mxu0 0.0
        %827 = vmatpush2.msra.mxu0 0.0
        %828 = vmatprep.subr.mxu0 0.0
        %829 = vmatpush2.msra.mxu0 0.0
        %830 = vmatprep.subr.mxu0 0.0
        %831 = vmatpush2.msra.mxu0 0.0
        %832 = vmatprep.subr.mxu0 0.0
        %833 = vmatpush2.msra.mxu0 0.0
        %834 = vmatprep.subr.mxu0 0.0
        %835 = vmatpush2.msra.mxu0 0.0
        %836 = vmatprep.subr.mxu0 0.0
        %837 = vmatpush2.msra.mxu0 0.0
        %838 = vmatprep.subr.mxu0 0.0
        %839 = vmatpush2.msra.mxu0 0.0
        %840 = vmatprep.subr.mxu0 0.0
        %841 = vmatpush2.msra.mxu0 0.0
        %842 = vmatprep.subr.mxu0 0.0
        %843 = vmatpush2.msra.mxu0 0.0
        %844 = vmatprep.subr.mxu0 0.0
        %845 = vmatpush2.msra.mxu0 0.0
        %846 = vmatprep.subr.mxu0 0.0
        %847 = vmatpush2.msra.mxu0 0.0
        %848 = vmatprep.subr.mxu0 0.0
        %849 = vmatpush2.msra.mxu0 0.0
        %850 = vmatprep.subr.mxu0 0.0
        %851 = vmatpush2.msra.mxu0 0.0
        %852 = vmatprep.mubr.f32.mxu0 0.0
        %853 = vmatmul.mubr.f32.gmra.mxu0 %v293
        %v854 = vpop.f32.mrf.mxu0
        %v855 = vadd.f32 0.0, %v854
        %v856 = vpop.f32.mrf.mxu0
        %v857 = vadd.f32 0.0, %v856
        %858 = vmatprep.mubr.f32.mxu0 0.0
        %859 = vmatmul.mubr.f32.gmra.mxu0 %v294
        %v860 = vpop.f32.mrf.mxu0
        %v861 = vadd.f32 0.0, %v860
        %v862 = vpop.f32.mrf.mxu0
        %v863 = vadd.f32 0.0, %v862
        %864 = vdwg.mxu0
        %v865 = vadd.f32 %v784, %v855
        %v866 = vadd.f32 %v785, %v857
        %v867 = vadd.f32 %v786, %v861
        %v868 = vadd.f32 %v787, %v863
        %869 = vst [vmem:[%s232] sm:$0xff] %v865
        %870 = vst [vmem:[%s232 + $0x8] sm:$0xff] %v866
        %871 = vst [vmem:[%s232 + $0x10] sm:$0xff] %v867
        %872 = vst [vmem:[%s232 + $0x18] sm:$0xff] %v868
        %s873 = sand.u32 %s128, 1
        %s874 = scalar_lea.sflag [#allocation3], %s873
        %s875 = sand.u32 %s128, 1
        %s876 = smul.addr %s875, 32
        %s877 = scalar_lea.vmem [#allocation2], %s876
        // Predicated region
        $region37: #{tpu_custom_call.1} parent=31 // pred_check
          %p878 = pneg %p138
        $region38: #{tpu_custom_call.1} parent=31 // pred_check_branch
          %880 = sbr.rel (%p878) target = $region40
        $region39: #{tpu_custom_call.1} parent=31 // pred_region
          %s881 = smul.u32 2, %s23
          %s883 = ssub.s32 512, 512
          %884 = vsyncadd %s874, %s883
          %s885 = smul.addr %s22, 4
          %s886 = sadd.s32 %s881, %s885
          %s887 = smul.addr %s886, 128
          %s888 = scalar_lea.hbm %s3, %s887
          %s889 = sshll.u32 %s877, 4
          %s890 = int_to_ptr.vmem [resolvable:$true] %s889
          %895 = dma.vmem_to_hbm [thread:$0]  %s890, 512, %s888, %s874, 256, 256, 16
        $region40: #{tpu_custom_call.1} parent=31 // pred_fallthru
          _
      $region32: #{tpu_custom_call.1} parent=5 // pred_fallthru
        _
      %p896 = scmp.le.s32.totalorder 2, %s12
      // Predicated region
      $region41: #{tpu_custom_call.1} parent=5 // pred_check
        %p897 = pneg %p896
      $region42: #{tpu_custom_call.1} parent=5 // pred_check_branch
        %899 = sbr.rel (%p897) target = $region44
      $region43: #{tpu_custom_call.1} parent=5 // pred_region
        %s900 = ssub.s32 %s12, 2
        // Predicated region
        $region45: #{tpu_custom_call.1} parent=43 // pred_check
          %p901 = pneg %p144
        $region46: #{tpu_custom_call.1} parent=43 // pred_check_branch
          %903 = sbr.rel (%p901) target = $region48
        $region47: #{tpu_custom_call.1} parent=43 // pred_region
          %s904 = sand.u32 %s129, 1
          %s905 = scalar_lea.sflag [#allocation3], %s904
          %s906 = sand.u32 %s129, 1
          %s907 = smul.addr %s906, 32
          %s908 = scalar_lea.vmem [#allocation2], %s907
          %909 = dma.done %s905, 512
        $region48: #{tpu_custom_call.1} parent=43 // pred_fallthru
          _
      $region44: #{tpu_custom_call.1} parent=5 // pred_fallthru
        _
    $region6: #{tpu_custom_call.1} parent=1 // loop_footer
      %s16 = sadd.s32 1, %s12
    $region7: #{tpu_custom_call.1} parent=1 // loop_footer_branch
      %11 = sbr.rel target = $region3
    $region8: #{tpu_custom_call.1} parent=1 // loop_exit
      _
    %910 = vsyncpa [#allocation3], 1
    %s911 = scalar_lea.sflag [#allocation3], 1
    %912 = vsyncpa %s911, 1

</llo_original>
